<compile_context>
chip_gen: v7x
topology: tpu7x:2x2x1
jax: 0.10.0
libtpu: 0.0.40
codegen_flags: <defaults>
</compile_context>

<pallas_src>
import jax
import jax.numpy as jnp
from jax.experimental import pallas as pl
from jax.experimental.pallas import tpu as pltpu


def attention_kernel(q_ref, k_ref, v_ref, w_ref, b_ref, o_ref):
    # q/k/v/o refs: (B_blk, L, H) VMEM tiles. w_ref: (H, 4H). b_ref: (1, 4H).
    B, L, H = q_ref.shape
    R = B * L

    # Flatten batch*seq into one row axis for the projection matmuls.
    q2 = q_ref[...].reshape(R, H)
    k2 = k_ref[...].reshape(R, H)
    v2 = v_ref[...].reshape(R, H)

    w = w_ref[...]          # (H, 4H): [Wq^T | Wk^T | Wv^T | Wo^T]
    b = b_ref[...]          # (1, 4H): [bq   | bk   | bv   | bo  ]

    # Q/K/V projections: (R, H) @ (H, H) MXU matmuls + bias broadcast.
    qp = jnp.dot(q2, w[:, 0 * H:1 * H], preferred_element_type=jnp.float32) + b[:, 0 * H:1 * H]
    kp = jnp.dot(k2, w[:, 1 * H:2 * H], preferred_element_type=jnp.float32) + b[:, 1 * H:2 * H]
    vp = jnp.dot(v2, w[:, 2 * H:3 * H], preferred_element_type=jnp.float32) + b[:, 2 * H:3 * H]

    qp3 = qp.reshape(B, L, H)
    kp3 = kp.reshape(B, L, H)
    vp3 = vp.reshape(B, L, H)

    # sims[b, i, j] = sum_h qp[b, i, h] * kp[b, j, h] — batched contraction,
    # no explicit transpose (stays on the MXU push path).
    sims = jnp.einsum('bqd,bkd->bqk', qp3, kp3,
                      preferred_element_type=jnp.float32)      # (B, L, L)

    # Numerically stable softmax over the key axis (dim=2 in the torch code).
    m = jnp.max(sims, axis=-1, keepdims=True)
    e = jnp.exp(sims - m)
    denom = jnp.sum(e, axis=-1, keepdims=True)
    attn = e * pl.reciprocal(denom, approx=True)                # EUP vrcp

    # contexts = attn @ V, then output projection on the flattened rows.
    ctx = jnp.einsum('bqk,bkd->bqd', attn, vp3,
                     preferred_element_type=jnp.float32)        # (B, L, H)
    ctx2 = ctx.reshape(R, H)
    out = jnp.dot(ctx2, w[:, 3 * H:4 * H],
                  preferred_element_type=jnp.float32) + b[:, 3 * H:4 * H]

    o_ref[...] = out.reshape(B, L, H).astype(o_ref.dtype)


def _pick_batch_block(N, L, target_rows=256):
    """Largest divisor b of N with b*L <= target_rows, keeping >= 2 grid steps
    whenever N >= 2 (so both v7x TensorCores get work)."""
    best = 1
    for b in range(1, N + 1):
        if N % b:
            continue
        if b * L > target_rows:
            continue
        if N >= 2 and N // b < 2:
            continue
        best = b
    return best


def attention_layer(q, k, v, params, *, target_rows=256):
    """q, k, v: (N, L, H). params: dict of torch-style (out,in) weights + (H,) biases."""
    N, L, H = q.shape
    B_blk = _pick_batch_block(N, L, target_rows)
    grid = N // B_blk

    # Pack four weights into one lane-dense (H, 4H) slab (pre-transposed so the
    # kernel does y = x @ W + b, matching nn.Linear's y = x @ W.T + b), and the
    # four biases into one (1, 4H) row.
    w_packed = jnp.concatenate(
        [params["wq"].T, params["wk"].T, params["wv"].T, params["wo"].T], axis=1)
    b_packed = jnp.concatenate(
        [params["bq"], params["bk"], params["bv"], params["bo"]]).reshape(1, 4 * H)

    data_spec = pl.BlockSpec((B_blk, L, H), lambda n: (n, 0, 0))
    w_spec = pl.BlockSpec((H, 4 * H), lambda n: (0, 0))       # VMEM-resident across grid
    b_spec = pl.BlockSpec((1, 4 * H), lambda n: (0, 0))

    # Advisory cost estimate for XLA's scheduler.
    cost = pl.CostEstimate(
        flops=2 * N * L * H * H * 4 + 2 * N * L * L * H * 2,
        transcendentals=N * L * L + N * L,
        bytes_accessed=4 * (3 * N * L * H + 4 * H * H + 4 * H + N * L * H),
    )

    grid_spec = pltpu.PrefetchScalarGridSpec(
        num_scalar_prefetch=0,
        grid=(grid,),
        in_specs=[data_spec, data_spec, data_spec, w_spec, b_spec],
        out_specs=pl.BlockSpec((B_blk, L, H), lambda n: (n, 0, 0)),
    )

    return pl.pallas_call(
        attention_kernel,
        out_shape=jax.ShapeDtypeStruct((N, L, H), q.dtype),
        grid_spec=grid_spec,
        compiler_params=pltpu.CompilerParams(dimension_semantics=("parallel",)),
        cost_estimate=cost,
    )(q, k, v, w_packed, b_packed)


def reference_attention(q, k, v, params):
    """Pure-JAX reference with identical semantics (exact reciprocal)."""
    qp = q @ params["wq"].T + params["bq"]
    kp = k @ params["wk"].T + params["bk"]
    vp = v @ params["wv"].T + params["bv"]
    sims = jnp.einsum("nih,njh->nij", qp, kp)
    attn = jax.nn.softmax(sims, axis=2)
    ctx = jnp.einsum("nij,njh->nih", attn, vp)
    return ctx @ params["wo"].T + params["bo"]


def init_params(key, hidden_size):
    """Deterministic torch.nn.Linear-style init: U(-1/sqrt(H), 1/sqrt(H))."""
    bound = 1.0 / jnp.sqrt(hidden_size)
    keys = jax.random.split(key, 8)
    u = lambda k, shape: jax.random.uniform(k, shape, jnp.float32, -bound, bound)
    return {
        "wq": u(keys[0], (hidden_size, hidden_size)), "bq": u(keys[1], (hidden_size,)),
        "wk": u(keys[2], (hidden_size, hidden_size)), "bk": u(keys[3], (hidden_size,)),
        "wv": u(keys[4], (hidden_size, hidden_size)), "bv": u(keys[5], (hidden_size,)),
        "wo": u(keys[6], (hidden_size, hidden_size)), "bo": u(keys[7], (hidden_size,)),
    }


if __name__ == "__main__":
    N, L, H = 2, 8, 32
    key = jax.random.PRNGKey(0)
    kq, kk, kv, kp = jax.random.split(key, 4)

    q = jax.random.normal(kq, (N, L, H), jnp.float32)
    k = jax.random.normal(kk, (N, L, H), jnp.float32)
    v = jax.random.normal(kv, (N, L, H), jnp.float32)
    params = init_params(kp, H)

    out = attention_layer(q, k, v, params)
    out = jax.block_until_ready(out)

    ref = reference_attention(q, k, v, params)
    assert out.shape == (N, L, H)
    # approx=True reciprocal in the softmax → allow ~1e-3-level error.
    assert jnp.allclose(out, ref, atol=2e-3, rtol=2e-3), "mismatch vs pure-JAX reference"

    print("KERNEL_OK")
</pallas_src>

<mosaic_0001>
module attributes {stable_mosaic.version = 11 : i64} {
  func.func @attention_kernel(%arg0: i32, %arg1: memref<1x8x32xf32, #tpu.memory_space<vmem>>, %arg2: memref<1x8x32xf32, #tpu.memory_space<vmem>>, %arg3: memref<1x8x32xf32, #tpu.memory_space<vmem>>, %arg4: memref<32x128xf32, #tpu.memory_space<vmem>>, %arg5: memref<1x128xf32, #tpu.memory_space<vmem>>, %arg6: memref<1x8x32xf32, #tpu.memory_space<vmem>>) attributes {dimension_semantics = [#tpu.dimension_semantics<parallel>], iteration_bounds = array<i64: 2>, scalar_prefetch = 0 : i64, scratch_operands = 0 : i64, tpu.core_type = #tpu.core_type<tc>, window_params = [{transform_indices = @transform_0, window_bounds = array<i64: 1, 8, 32>}, {transform_indices = @transform_1, window_bounds = array<i64: 1, 8, 32>}, {transform_indices = @transform_2, window_bounds = array<i64: 1, 8, 32>}, {pipeline_mode = #tpu.pipeline_mode<synchronous>, transform_indices = @transform_3, window_bounds = array<i64: 32, 128>}, {pipeline_mode = #tpu.pipeline_mode<synchronous>, transform_indices = @transform_4, window_bounds = array<i64: 1, 128>}, {transform_indices = @transform_5, window_bounds = array<i64: 1, 8, 32>}]} {
    %c0 = arith.constant 0 : index
    %c0_0 = arith.constant 0 : index
    %c0_1 = arith.constant 0 : index
    %0 = vector.load %arg1[%c0, %c0_0, %c0_1] : memref<1x8x32xf32, #tpu.memory_space<vmem>>, vector<1x8x32xf32>
    %1 = vector.shape_cast %0 : vector<1x8x32xf32> to vector<8x32xf32>
    %c0_2 = arith.constant 0 : index
    %c0_3 = arith.constant 0 : index
    %c0_4 = arith.constant 0 : index
    %2 = vector.load %arg2[%c0_2, %c0_3, %c0_4] : memref<1x8x32xf32, #tpu.memory_space<vmem>>, vector<1x8x32xf32>
    %3 = vector.shape_cast %2 : vector<1x8x32xf32> to vector<8x32xf32>
    %c0_5 = arith.constant 0 : index
    %c0_6 = arith.constant 0 : index
    %c0_7 = arith.constant 0 : index
    %4 = vector.load %arg3[%c0_5, %c0_6, %c0_7] : memref<1x8x32xf32, #tpu.memory_space<vmem>>, vector<1x8x32xf32>
    %5 = vector.shape_cast %4 : vector<1x8x32xf32> to vector<8x32xf32>
    %c0_8 = arith.constant 0 : index
    %c0_9 = arith.constant 0 : index
    %6 = vector.load %arg4[%c0_8, %c0_9] : memref<32x128xf32, #tpu.memory_space<vmem>>, vector<32x128xf32>
    %c0_10 = arith.constant 0 : index
    %c0_11 = arith.constant 0 : index
    %7 = vector.load %arg5[%c0_10, %c0_11] : memref<1x128xf32, #tpu.memory_space<vmem>>, vector<1x128xf32>
    %8 = vector.extract_strided_slice %6 {offsets = [0, 0], sizes = [32, 32], strides = [1, 1]} : vector<32x128xf32> to vector<32x32xf32>
    %cst = arith.constant dense<0.000000e+00> : vector<8x32xf32>
    %9 = tpu.matmul %1, %8, %cst {dimension_numbers = #tpu.dot_dimension_numbers<[1], [0], [0], [1], [0, 0, 1, 1], [], []>} : vector<8x32xf32>, vector<32x32xf32>, vector<8x32xf32> -> vector<8x32xf32>
    %10 = vector.extract_strided_slice %7 {offsets = [0, 0], sizes = [1, 32], strides = [1, 1]} : vector<1x128xf32> to vector<1x32xf32>
    %11 = vector.broadcast %10 : vector<1x32xf32> to vector<8x32xf32>
    %12 = arith.addf %9, %11 : vector<8x32xf32>
    %13 = vector.extract_strided_slice %6 {offsets = [0, 32], sizes = [32, 32], strides = [1, 1]} : vector<32x128xf32> to vector<32x32xf32>
    %cst_12 = arith.constant dense<0.000000e+00> : vector<8x32xf32>
    %14 = tpu.matmul %3, %13, %cst_12 {dimension_numbers = #tpu.dot_dimension_numbers<[1], [0], [0], [1], [0, 0, 1, 1], [], []>} : vector<8x32xf32>, vector<32x32xf32>, vector<8x32xf32> -> vector<8x32xf32>
    %15 = vector.extract_strided_slice %7 {offsets = [0, 32], sizes = [1, 32], strides = [1, 1]} : vector<1x128xf32> to vector<1x32xf32>
    %16 = vector.broadcast %15 : vector<1x32xf32> to vector<8x32xf32>
    %17 = arith.addf %14, %16 : vector<8x32xf32>
    %18 = vector.extract_strided_slice %6 {offsets = [0, 64], sizes = [32, 32], strides = [1, 1]} : vector<32x128xf32> to vector<32x32xf32>
    %cst_13 = arith.constant dense<0.000000e+00> : vector<8x32xf32>
    %19 = tpu.matmul %5, %18, %cst_13 {dimension_numbers = #tpu.dot_dimension_numbers<[1], [0], [0], [1], [0, 0, 1, 1], [], []>} : vector<8x32xf32>, vector<32x32xf32>, vector<8x32xf32> -> vector<8x32xf32>
    %20 = vector.extract_strided_slice %7 {offsets = [0, 64], sizes = [1, 32], strides = [1, 1]} : vector<1x128xf32> to vector<1x32xf32>
    %21 = vector.broadcast %20 : vector<1x32xf32> to vector<8x32xf32>
    %22 = arith.addf %19, %21 : vector<8x32xf32>
    %23 = vector.shape_cast %12 : vector<8x32xf32> to vector<1x8x32xf32>
    %24 = vector.shape_cast %17 : vector<8x32xf32> to vector<1x8x32xf32>
    %25 = vector.shape_cast %22 : vector<8x32xf32> to vector<1x8x32xf32>
    "tpu.trace_start"() <{level = 10 : i32, message = "bqd,bkd->bqk"}> : () -> ()
    %cst_14 = arith.constant dense<0.000000e+00> : vector<1x8x8xf32>
    %26 = tpu.matmul %23, %24, %cst_14 {dimension_numbers = #tpu.dot_dimension_numbers<[2], [2], [1], [1], [0, 0, 0, 1, 1, 1], [0], [0]>} : vector<1x8x32xf32>, vector<1x8x32xf32>, vector<1x8x8xf32> -> vector<1x8x8xf32>
    "tpu.trace_stop"() : () -> ()
    %cst_15 = arith.constant dense<0xFF800000> : vector<1x8xf32>
    %27 = vector.multi_reduction <maximumf>, %26, %cst_15 [2] : vector<1x8x8xf32> to vector<1x8xf32>
    %28 = vector.shape_cast %27 : vector<1x8xf32> to vector<1x8x1xf32>
    %29 = vector.broadcast %28 : vector<1x8x1xf32> to vector<1x8x8xf32>
    %30 = arith.subf %26, %29 : vector<1x8x8xf32>
    %31 = math.exp %30 : vector<1x8x8xf32>
    %cst_16 = arith.constant dense<0.000000e+00> : vector<1x8xf32>
    %32 = vector.multi_reduction <add>, %31, %cst_16 [2] : vector<1x8x8xf32> to vector<1x8xf32>
    %33 = vector.shape_cast %32 : vector<1x8xf32> to vector<1x8x1xf32>
    %34 = tpu.reciprocal %33 {approx = true} : vector<1x8x1xf32> -> vector<1x8x1xf32>
    %35 = vector.broadcast %34 : vector<1x8x1xf32> to vector<1x8x8xf32>
    %36 = arith.mulf %31, %35 : vector<1x8x8xf32>
    "tpu.trace_start"() <{level = 10 : i32, message = "bqk,bkd->bqd"}> : () -> ()
    %cst_17 = arith.constant dense<0.000000e+00> : vector<1x8x32xf32>
    %37 = tpu.matmul %36, %25, %cst_17 {dimension_numbers = #tpu.dot_dimension_numbers<[2], [1], [1], [2], [0, 0, 0, 1, 1, 2], [0], [0]>} : vector<1x8x8xf32>, vector<1x8x32xf32>, vector<1x8x32xf32> -> vector<1x8x32xf32>
    "tpu.trace_stop"() : () -> ()
    %38 = vector.shape_cast %37 : vector<1x8x32xf32> to vector<8x32xf32>
    %39 = vector.extract_strided_slice %6 {offsets = [0, 96], sizes = [32, 32], strides = [1, 1]} : vector<32x128xf32> to vector<32x32xf32>
    %cst_18 = arith.constant dense<0.000000e+00> : vector<8x32xf32>
    %40 = tpu.matmul %38, %39, %cst_18 {dimension_numbers = #tpu.dot_dimension_numbers<[1], [0], [0], [1], [0, 0, 1, 1], [], []>} : vector<8x32xf32>, vector<32x32xf32>, vector<8x32xf32> -> vector<8x32xf32>
    %41 = vector.extract_strided_slice %7 {offsets = [0, 96], sizes = [1, 32], strides = [1, 1]} : vector<1x128xf32> to vector<1x32xf32>
    %42 = vector.broadcast %41 : vector<1x32xf32> to vector<8x32xf32>
    %43 = arith.addf %40, %42 : vector<8x32xf32>
    %44 = vector.shape_cast %43 : vector<8x32xf32> to vector<1x8x32xf32>
    %c0_19 = arith.constant 0 : index
    %c0_20 = arith.constant 0 : index
    %c0_21 = arith.constant 0 : index
    %45 = vector.load %arg6[%c0_19, %c0_20, %c0_21] : memref<1x8x32xf32, #tpu.memory_space<vmem>>, vector<1x8x32xf32>
    tpu.vector_store %arg6[%c0_19, %c0_20, %c0_21], %44 {strides = array<i32>} : memref<1x8x32xf32, #tpu.memory_space<vmem>>, vector<1x8x32xf32>,
    return
  }
  func.func @transform_0(%arg0: i32) -> (i32, i32, i32) {
    %c0_i32 = arith.constant 0 : i32
    %c0_i32_0 = arith.constant 0 : i32
    %c0_i32_1 = arith.constant 0 : i32
    return %arg0, %c0_i32, %c0_i32_0 : i32, i32, i32
  }
  func.func @transform_1(%arg0: i32) -> (i32, i32, i32) {
    %c0_i32 = arith.constant 0 : i32
    %c0_i32_0 = arith.constant 0 : i32
    %c0_i32_1 = arith.constant 0 : i32
    return %arg0, %c0_i32, %c0_i32_0 : i32, i32, i32
  }
  func.func @transform_2(%arg0: i32) -> (i32, i32, i32) {
    %c0_i32 = arith.constant 0 : i32
    %c0_i32_0 = arith.constant 0 : i32
    %c0_i32_1 = arith.constant 0 : i32
    return %arg0, %c0_i32, %c0_i32_0 : i32, i32, i32
  }
  func.func @transform_3(%arg0: i32) -> (i32, i32) {
    %c0_i32 = arith.constant 0 : i32
    %c0_i32_0 = arith.constant 0 : i32
    %c0_i32_1 = arith.constant 0 : i32
    return %c0_i32, %c0_i32_0 : i32, i32
  }
  func.func @transform_4(%arg0: i32) -> (i32, i32) {
    %c0_i32 = arith.constant 0 : i32
    %c0_i32_0 = arith.constant 0 : i32
    %c0_i32_1 = arith.constant 0 : i32
    return %c0_i32, %c0_i32_0 : i32, i32
  }
  func.func @transform_5(%arg0: i32) -> (i32, i32, i32) {
    %c0_i32 = arith.constant 0 : i32
    %c0_i32_0 = arith.constant 0 : i32
    %c0_i32_1 = arith.constant 0 : i32
    return %arg0, %c0_i32, %c0_i32_0 : i32, i32, i32
  }
}

</mosaic_0001>

<llo_original>
// kernel: tpu_custom_call.1
$region0: #{tpu_custom_call.1}
  #allocation0 [shape = 'u32[]', space=smem, size = 0x4, offset = 0x4, fixed_abs, tag = 'smem constant byte address 0x4 - core index']
  #allocation1 [shape = 'u32[144,128]{1,0:T(1,128)}', space=vmem, size = 0x12000, scoped, tag = 'internal scratch']
  %s0 = inlined_call_operand.hbm [shape: f32[2,8,32], index: 0, kind: input, shape index: {}]
  %s1 = inlined_call_operand.hbm [shape: f32[2,8,32], index: 1, kind: input, shape index: {}]
  %s2 = inlined_call_operand.hbm [shape: f32[2,8,32], index: 2, kind: input, shape index: {}]
  %s3 = inlined_call_operand.hbm [shape: f32[32,128], index: 3, kind: input, shape index: {}]
  %s4 = inlined_call_operand.vmem [shape: f32[1,128], index: 4, kind: input, shape index: {}]
  %s5 = inlined_call_operand.hbm [shape: f32[2,8,32], index: 5, kind: output, shape index: {}]
  %s6 = sld [smem:[#allocation0]]
  $region69: #{tpu_custom_call.1} parent=0
    _
  %s8 = ssub.s32 1, %s6
  %s9 = scalar_select 0, %s8, %s6
  $region1: #{tpu_custom_call.1} parent=0
    #allocation2 [shape = 'u8[8192]{0}', space=vmem, size = 0x2000, scoped, tag = 'input window, operand 0']
    #allocation3 [shape = 's32[2]{0}', space=sflag, size = 0x8, scoped, tag = 'scoped memory for tpu_custom_call.1']
    #allocation4 [shape = 's32[2]{0}', space=sflag, size = 0x8, scoped, tag = 'scoped memory for tpu_custom_call.1']
    #allocation5 [shape = 'u8[8192]{0}', space=vmem, size = 0x2000, scoped, tag = 'input window, operand 1']
    #allocation6 [shape = 's32[2]{0}', space=sflag, size = 0x8, scoped, tag = 'scoped memory for tpu_custom_call.1']
    #allocation7 [shape = 'u8[8192]{0}', space=vmem, size = 0x2000, scoped, tag = 'input window, operand 2']
    #allocation8 [shape = 'u8[16384]{0}', space=vmem, size = 0x4000, scoped, tag = 'input window, operand 3, single buffered']
    #allocation9 [shape = 's32[1]{0}', space=sflag, size = 0x4, scoped, tag = 'scoped memory for tpu_custom_call.1']
    #allocation10 [shape = 'u8[8192]{0}', space=vmem, size = 0x2000, scoped, tag = 'output window, operand 0']
    %10 = vsyncpa [#allocation3], 0
    %s11 = scalar_lea.sflag [#allocation3], 1
    %12 = vsyncpa %s11, 0
    %13 = vsyncpa [#allocation6], 0
    %s14 = scalar_lea.sflag [#allocation6], 1
    %15 = vsyncpa %s14, 0
    %16 = vsyncpa [#allocation9], 0
    %17 = vsyncpa [#allocation4], 0
    %s18 = scalar_lea.sflag [#allocation4], 1
    %19 = vsyncpa %s18, 0
    loop: start=0, step=1, limit=4
    $region2: #{tpu_custom_call.1} parent=1 // loop_pre_header
      _
    $region3: #{tpu_custom_call.1} parent=1 // loop_header
      %s21 = sphi 0, %s25
      %p22 = scmp.ge.s32.totalorder %s21, 4
      %s31 = sphi 0, %s33
      %s34 = sphi 0, %s31
      %s35 = sphi 0, %s34
      %s51 = sphi 0, %s35
      %s57 = sphi 0, %s59
      %s60 = sphi 0, %s57
      %s61 = sphi 0, %s60
      %s77 = sphi 0, %s61
      %s83 = sphi 0, %s85
      %s86 = sphi 0, %s83
      %s87 = sphi 0, %s86
      %s103 = sphi 0, %s87
      %s107 = sphi 0, %s107
      %s109 = sphi 0, %s107
      %s110 = sphi 0, %s109
      %s124 = sphi 0, %s110
      %s128 = sphi 0, %s128
      %s130 = sphi 0, %s128
      %s131 = sphi 0, %s130
      %s145 = sphi 0, %s131
      %s151 = sphi 0, %s153
      %s154 = sphi 0, %s151
      %s155 = sphi 0, %s154
      %s171 = sphi 0, %s155
    $region4: #{tpu_custom_call.1} parent=1 // loop_header_branch
      %24 = sbr.rel (%p22) target = $region8
    $region5: #{tpu_custom_call.1} parent=1 // loop_body
      %s26 = ssub.s32 %s21, 1
      %s27 = ssub.s32 %s21, 2
      %s28 = sadd.s32 %s21, 1
      %s29 = ssub.s32 %s21, %s28
      %p30 = scmp.eq.s32.totalorder %s29, 0
      %s32 = sadd.s32 %s31, 1
      %s33 = scalar_select %p30, %s31, %s32
      %p36 = pneg %p30
      %p37 = scmp.eq.s32.totalorder %s21, 1
      %p38 = por %p36, %p37
      %p39 = scmp.ne.s32.totalorder %s31, %s34
      %p40 = scmp.eq.s32.totalorder %s21, 0
      %p41 = por %p39, %p40
      %p42 = scmp.ne.s32.totalorder %s31, %s34
      %p43 = scmp.eq.s32.totalorder %s26, 1
      %p44 = por %p42, %p43
      %p45 = scmp.ne.s32.totalorder %s34, %s35
      %p46 = scmp.eq.s32.totalorder %s26, 0
      %p47 = por %p45, %p46
      %p48 = scmp.ne.s32.totalorder %s34, %s35
      %p49 = scmp.eq.s32.totalorder %s27, 1
      %p50 = por %p48, %p49
      %p52 = scmp.ne.s32.totalorder %s35, %s51
      %p53 = scmp.eq.s32.totalorder %s27, 0
      %p54 = por %p52, %p53
      %s55 = ssub.s32 %s21, %s28
      %p56 = scmp.eq.s32.totalorder %s55, 0
      %s58 = sadd.s32 %s57, 1
      %s59 = scalar_select %p56, %s57, %s58
      %p62 = pneg %p56
      %p63 = scmp.eq.s32.totalorder %s21, 1
      %p64 = por %p62, %p63
      %p65 = scmp.ne.s32.totalorder %s57, %s60
      %p66 = scmp.eq.s32.totalorder %s21, 0
      %p67 = por %p65, %p66
      %p68 = scmp.ne.s32.totalorder %s57, %s60
      %p69 = scmp.eq.s32.totalorder %s26, 1
      %p70 = por %p68, %p69
      %p71 = scmp.ne.s32.totalorder %s60, %s61
      %p72 = scmp.eq.s32.totalorder %s26, 0
      %p73 = por %p71, %p72
      %p74 = scmp.ne.s32.totalorder %s60, %s61
      %p75 = scmp.eq.s32.totalorder %s27, 1
      %p76 = por %p74, %p75
      %p78 = scmp.ne.s32.totalorder %s61, %s77
      %p79 = scmp.eq.s32.totalorder %s27, 0
      %p80 = por %p78, %p79
      %s81 = ssub.s32 %s21, %s28
      %p82 = scmp.eq.s32.totalorder %s81, 0
      %s84 = sadd.s32 %s83, 1
      %s85 = scalar_select %p82, %s83, %s84
      %p88 = pneg %p82
      %p89 = scmp.eq.s32.totalorder %s21, 1
      %p90 = por %p88, %p89
      %p91 = scmp.ne.s32.totalorder %s83, %s86
      %p92 = scmp.eq.s32.totalorder %s21, 0
      %p93 = por %p91, %p92
      %p94 = scmp.ne.s32.totalorder %s83, %s86
      %p95 = scmp.eq.s32.totalorder %s26, 1
      %p96 = por %p94, %p95
      %p97 = scmp.ne.s32.totalorder %s86, %s87
      %p98 = scmp.eq.s32.totalorder %s26, 0
      %p99 = por %p97, %p98
      %p100 = scmp.ne.s32.totalorder %s86, %s87
      %p101 = scmp.eq.s32.totalorder %s27, 1
      %p102 = por %p100, %p101
      %p104 = scmp.ne.s32.totalorder %s87, %s103
      %p105 = scmp.eq.s32.totalorder %s27, 0
      %p106 = por %p104, %p105
      %s108 = sadd.s32 %s107, 1
      %p111 = scmp.eq.s32.totalorder %s21, 1
      %p112 = scmp.ne.s32.totalorder %s107, %s109
      %p113 = scmp.eq.s32.totalorder %s21, 0
      %p114 = por %p112, %p113
      %p115 = scmp.ne.s32.totalorder %s107, %s109
      %p116 = scmp.eq.s32.totalorder %s26, 1
      %p117 = por %p115, %p116
      %p118 = scmp.ne.s32.totalorder %s109, %s110
      %p119 = scmp.eq.s32.totalorder %s26, 0
      %p120 = por %p118, %p119
      %p121 = scmp.ne.s32.totalorder %s109, %s110
      %p122 = scmp.eq.s32.totalorder %s27, 1
      %p123 = por %p121, %p122
      %p125 = scmp.ne.s32.totalorder %s110, %s124
      %p126 = scmp.eq.s32.totalorder %s27, 0
      %p127 = por %p125, %p126
      %s129 = sadd.s32 %s128, 1
      %p132 = scmp.eq.s32.totalorder %s21, 1
      %p133 = scmp.ne.s32.totalorder %s128, %s130
      %p134 = scmp.eq.s32.totalorder %s21, 0
      %p135 = por %p133, %p134
      %p136 = scmp.ne.s32.totalorder %s128, %s130
      %p137 = scmp.eq.s32.totalorder %s26, 1
      %p138 = por %p136, %p137
      %p139 = scmp.ne.s32.totalorder %s130, %s131
      %p140 = scmp.eq.s32.totalorder %s26, 0
      %p141 = por %p139, %p140
      %p142 = scmp.ne.s32.totalorder %s130, %s131
      %p143 = scmp.eq.s32.totalorder %s27, 1
      %p144 = por %p142, %p143
      %p146 = scmp.ne.s32.totalorder %s131, %s145
      %p147 = scmp.eq.s32.totalorder %s27, 0
      %p148 = por %p146, %p147
      %s149 = ssub.s32 %s21, %s28
      %p150 = scmp.eq.s32.totalorder %s149, 0
      %s152 = sadd.s32 %s151, 1
      %s153 = scalar_select %p150, %s151, %s152
      %p156 = pneg %p150
      %p157 = scmp.eq.s32.totalorder %s21, 1
      %p158 = por %p156, %p157
      %p159 = scmp.ne.s32.totalorder %s151, %s154
      %p160 = scmp.eq.s32.totalorder %s21, 0
      %p161 = por %p159, %p160
      %p162 = scmp.ne.s32.totalorder %s151, %s154
      %p163 = scmp.eq.s32.totalorder %s26, 1
      %p164 = por %p162, %p163
      %p165 = scmp.ne.s32.totalorder %s154, %s155
      %p166 = scmp.eq.s32.totalorder %s26, 0
      %p167 = por %p165, %p166
      %p168 = scmp.ne.s32.totalorder %s154, %s155
      %p169 = scmp.eq.s32.totalorder %s27, 1
      %p170 = por %p168, %p169
      %p172 = scmp.ne.s32.totalorder %s155, %s171
      %p173 = scmp.eq.s32.totalorder %s27, 0
      %p174 = por %p172, %p173
      %p175 = scmp.le.s32.totalorder 1, %s21
      %p176 = scmp.lt.s32.totalorder %s21, 3
      %p177 = pnand %p175, %p176
      %p178 = pneg %p177
      // Predicated region
      $region9: #{tpu_custom_call.1} parent=5 // pred_check
        _
      $region10: #{tpu_custom_call.1} parent=5 // pred_check_branch
        %180 = sbr.rel (%p177) target = $region12
      $region11: #{tpu_custom_call.1} parent=5 // pred_region
        %s181 = ssub.s32 %s21, 1
        // Predicated region
        $region13: #{tpu_custom_call.1} parent=11 // pred_check
          %p182 = pneg %p120
        $region14: #{tpu_custom_call.1} parent=11 // pred_check_branch
          %184 = sbr.rel (%p182) target = $region16
        $region15: #{tpu_custom_call.1} parent=11 // pred_region
          %s186 = ssub.s32 512, 512
          %187 = vsyncadd [#allocation9], %s186
          %s188 = sshll.u32 [#allocation8], 4
          %s189 = int_to_ptr.vmem [resolvable:$true] %s188
          %194 = dma.hbm_to_vmem [thread:$0]  %s3, 512, %s189, [#allocation9], 128, 128, 8
        $region16: #{tpu_custom_call.1} parent=11 // pred_fallthru
          _
        // Predicated region
        $region17: #{tpu_custom_call.1} parent=11 // pred_check
          %p195 = pneg %p141
        $region18: #{tpu_custom_call.1} parent=11 // pred_check_branch
          %197 = sbr.rel (%p195) target = $region20
        $region19: #{tpu_custom_call.1} parent=11 // pred_region
          _
        $region20: #{tpu_custom_call.1} parent=11 // pred_fallthru
          _
      $region12: #{tpu_custom_call.1} parent=5 // pred_fallthru
        _
      %p198 = scmp.lt.s32.totalorder %s21, 2
      // Predicated region
      $region21: #{tpu_custom_call.1} parent=5 // pred_check
        %p199 = pneg %p198
      $region22: #{tpu_custom_call.1} parent=5 // pred_check_branch
        %201 = sbr.rel (%p199) target = $region24
      $region23: #{tpu_custom_call.1} parent=5 // pred_region
        // Predicated region
        $region25: #{tpu_custom_call.1} parent=23 // pred_check
          %p202 = pneg %p41
        $region26: #{tpu_custom_call.1} parent=23 // pred_check_branch
          %204 = sbr.rel (%p202) target = $region28
        $region27: #{tpu_custom_call.1} parent=23 // pred_region
          %s205 = sand.u32 %s31, 1
          %s206 = scalar_lea.sflag [#allocation3], %s205
          %s207 = sand.u32 %s31, 1
          %s208 = smul.addr %s207, 8
          %s209 = scalar_lea.vmem [#allocation2], %s208
          %s211 = ssub.s32 128, 128
          %212 = vsyncadd %s206, %s211
          %s213 = smul.addr %s21, 128
          %s214 = scalar_lea.hbm %s0, %s213
          %s216 = sshll.u32 %s209, 4
          %s217 = int_to_ptr.vmem [resolvable:$true] %s216
          %219 = dma.hbm_to_vmem [thread:$0]  %s214, 128, %s217, %s206
        $region28: #{tpu_custom_call.1} parent=23 // pred_fallthru
          _
        // Predicated region
        $region29: #{tpu_custom_call.1} parent=23 // pred_check
          %p220 = pneg %p67
        $region30: #{tpu_custom_call.1} parent=23 // pred_check_branch
          %222 = sbr.rel (%p220) target = $region32
        $region31: #{tpu_custom_call.1} parent=23 // pred_region
          %s223 = sand.u32 %s21, 1
          %s224 = scalar_lea.sflag [#allocation6], %s223
          %s225 = sand.u32 %s57, 1
          %s226 = smul.addr %s225, 8
          %s227 = scalar_lea.vmem [#allocation5], %s226
          %s229 = ssub.s32 128, 128
          %230 = vsyncadd %s224, %s229
          %s231 = smul.addr %s21, 128
          %s232 = scalar_lea.hbm %s1, %s231
          %s234 = sshll.u32 %s227, 4
          %s235 = int_to_ptr.vmem [resolvable:$true] %s234
          %237 = dma.hbm_to_vmem [thread:$0]  %s232, 128, %s235, %s224
        $region32: #{tpu_custom_call.1} parent=23 // pred_fallthru
          _
        // Predicated region
        $region33: #{tpu_custom_call.1} parent=23 // pred_check
          %p238 = pneg %p93
        $region34: #{tpu_custom_call.1} parent=23 // pred_check_branch
          %240 = sbr.rel (%p238) target = $region36
        $region35: #{tpu_custom_call.1} parent=23 // pred_region
          %s241 = sand.u32 %s21, 1
          %s242 = scalar_lea.sflag [#allocation6], %s241
          %s243 = sand.u32 %s83, 1
          %s244 = smul.addr %s243, 8
          %s245 = scalar_lea.vmem [#allocation7], %s244
          %s247 = ssub.s32 128, 128
          %248 = vsyncadd %s242, %s247
          %s249 = smul.addr %s21, 128
          %s250 = scalar_lea.hbm %s2, %s249
          %s252 = sshll.u32 %s245, 4
          %s253 = int_to_ptr.vmem [resolvable:$true] %s252
          %255 = dma.hbm_to_vmem [thread:$0]  %s250, 128, %s253, %s242
        $region36: #{tpu_custom_call.1} parent=23 // pred_fallthru
          _
      $region24: #{tpu_custom_call.1} parent=5 // pred_fallthru
        _
      %p256 = scmp.le.s32.totalorder 1, %s21
      %p257 = scmp.lt.s32.totalorder %s21, 3
      %p258 = pnand %p256, %p257
      %p259 = pneg %p258
      // Predicated region
      $region37: #{tpu_custom_call.1} parent=5 // pred_check
        _
      $region38: #{tpu_custom_call.1} parent=5 // pred_check_branch
        %261 = sbr.rel (%p258) target = $region40
      $region39: #{tpu_custom_call.1} parent=5 // pred_region
        %s262 = ssub.s32 %s21, 1
        %s263 = sand.u32 %s34, 1
        %s264 = scalar_lea.sflag [#allocation3], %s263
        %s265 = sand.u32 %s34, 1
        %s266 = smul.addr %s265, 8
        %s267 = scalar_lea.vmem [#allocation2], %s266
        // Predicated region
        $region41: #{tpu_custom_call.1} parent=39 // pred_check
          %p268 = pneg %p47
        $region42: #{tpu_custom_call.1} parent=39 // pred_check_branch
          %270 = sbr.rel (%p268) target = $region44
        $region43: #{tpu_custom_call.1} parent=39 // pred_region
          %271 = dma.done %s264, 128
        $region44: #{tpu_custom_call.1} parent=39 // pred_fallthru
          _
        %s272 = sand.u32 %s26, 1
        %s273 = scalar_lea.sflag [#allocation6], %s272
        %s274 = sand.u32 %s60, 1
        %s275 = smul.addr %s274, 8
        %s276 = scalar_lea.vmem [#allocation5], %s275
        // Predicated region
        $region45: #{tpu_custom_call.1} parent=39 // pred_check
          %p277 = pneg %p73
        $region46: #{tpu_custom_call.1} parent=39 // pred_check_branch
          %279 = sbr.rel (%p277) target = $region48
        $region47: #{tpu_custom_call.1} parent=39 // pred_region
          %280 = dma.done %s273, 128
        $region48: #{tpu_custom_call.1} parent=39 // pred_fallthru
          _
        %s281 = sand.u32 %s26, 1
        %s282 = scalar_lea.sflag [#allocation6], %s281
        %s283 = sand.u32 %s86, 1
        %s284 = smul.addr %s283, 8
        %s285 = scalar_lea.vmem [#allocation7], %s284
        // Predicated region
        $region49: #{tpu_custom_call.1} parent=39 // pred_check
          %p286 = pneg %p99
        $region50: #{tpu_custom_call.1} parent=39 // pred_check_branch
          %288 = sbr.rel (%p286) target = $region52
        $region51: #{tpu_custom_call.1} parent=39 // pred_region
          %289 = dma.done %s282, 128
        $region52: #{tpu_custom_call.1} parent=39 // pred_fallthru
          _
        // Predicated region
        $region53: #{tpu_custom_call.1} parent=39 // pred_check
          %p290 = pneg %p120
        $region54: #{tpu_custom_call.1} parent=39 // pred_check_branch
          %292 = sbr.rel (%p290) target = $region56
        $region55: #{tpu_custom_call.1} parent=39 // pred_region
          %293 = dma.done [#allocation9], 512
        $region56: #{tpu_custom_call.1} parent=39 // pred_fallthru
          _
        %s294 = sand.u32 %s34, 1
        %s295 = scalar_lea.sflag [#allocation3], %s294
        %s296 = sand.u32 %s34, 1
        %s297 = smul.addr %s296, 8
        %s298 = scalar_lea.vmem [#allocation2], %s297
        %p299 = pneg %p47
        %p300 = pneg %p44
        %s301 = sand.u32 %s26, 1
        %s302 = scalar_lea.sflag [#allocation6], %s301
        %s303 = sand.u32 %s60, 1
        %s304 = smul.addr %s303, 8
        %s305 = scalar_lea.vmem [#allocation5], %s304
        %p306 = pneg %p73
        %p307 = pneg %p70
        %s308 = sand.u32 %s26, 1
        %s309 = scalar_lea.sflag [#allocation6], %s308
        %s310 = sand.u32 %s86, 1
        %s311 = smul.addr %s310, 8
        %s312 = scalar_lea.vmem [#allocation7], %s311
        %p313 = pneg %p99
        %p314 = pneg %p96
        %p315 = pneg %p120
        %p316 = pneg %p117
        %p317 = pneg %p141
        %p318 = pneg %p138
        %p319 = pneg %p167
        %p320 = pneg %p164
        %s321 = sand.u32 %s154, 1
        %s322 = scalar_lea.sflag [#allocation4], %s321
        %s323 = sand.u32 %s154, 1
        %s324 = smul.addr %s323, 8
        %s325 = scalar_lea.vmem [#allocation10], %s324
        %v326 = vld [vmem:[%s267] sm:$0xff]
        %v327 = vld [vmem:[%s276] sm:$0xff]
        %v328 = vld [vmem:[%s285] sm:$0xff]
        %v329 = vld [vmem:[#allocation8] sm:$0xff]
        %v330 = vld [vmem:[#allocation8 + $0x8] sm:$0xff]
        %v331 = vld [vmem:[#allocation8 + $0x10] sm:$0xff]
        %v332 = vld [vmem:[#allocation8 + $0x18] sm:$0xff]
        %v333 = vld [vmem:[%s4] sm:$0x1]
        %v335 = vlaneseq
        %v336 = vshrl.u32 %v335, 7
        %v337 = vsub.s32 0, %v336
        %v338 = vrot.slane %v333, %v337
        %vm340 = vcmask 261120
        %v342 = vsel %vm340, %v326, 0
        %344 = vmatprep.subr.mxu0 0.0
        %345 = vmatpush1.msra.mxu0 %v329
        %346 = vmatprep.subr.mxu0 0.0
        %347 = vmatpush1.msra.mxu0 %v330
        %348 = vmatprep.subr.mxu0 0.0
        %349 = vmatpush1.msra.mxu0 %v331
        %350 = vmatprep.subr.mxu0 0.0
        %351 = vmatpush1.msra.mxu0 %v332
        %352 = vmatprep.subr.mxu0 0.0
        %353 = vmatpush1.msra.mxu0 0.0
        %354 = vmatprep.subr.mxu0 0.0
        %355 = vmatpush1.msra.mxu0 0.0
        %356 = vmatprep.subr.mxu0 0.0
        %357 = vmatpush1.msra.mxu0 0.0
        %358 = vmatprep.subr.mxu0 0.0
        %359 = vmatpush1.msra.mxu0 0.0
        %360 = vmatprep.subr.mxu0 0.0
        %361 = vmatpush1.msra.mxu0 0.0
        %362 = vmatprep.subr.mxu0 0.0
        %363 = vmatpush1.msra.mxu0 0.0
        %364 = vmatprep.subr.mxu0 0.0
        %365 = vmatpush1.msra.mxu0 0.0
        %366 = vmatprep.subr.mxu0 0.0
        %367 = vmatpush1.msra.mxu0 0.0
        %368 = vmatprep.subr.mxu0 0.0
        %369 = vmatpush1.msra.mxu0 0.0
        %370 = vmatprep.subr.mxu0 0.0
        %371 = vmatpush1.msra.mxu0 0.0
        %372 = vmatprep.subr.mxu0 0.0
        %373 = vmatpush1.msra.mxu0 0.0
        %374 = vmatprep.subr.mxu0 0.0
        %375 = vmatpush1.msra.mxu0 0.0
        %376 = vmatprep.subr.mxu0 0.0
        %377 = vmatpush1.msra.mxu0 0.0
        %378 = vmatprep.subr.mxu0 0.0
        %379 = vmatpush1.msra.mxu0 0.0
        %380 = vmatprep.subr.mxu0 0.0
        %381 = vmatpush1.msra.mxu0 0.0
        %382 = vmatprep.subr.mxu0 0.0
        %383 = vmatpush1.msra.mxu0 0.0
        %384 = vmatprep.subr.mxu0 0.0
        %385 = vmatpush1.msra.mxu0 0.0
        %386 = vmatprep.subr.mxu0 0.0
        %387 = vmatpush1.msra.mxu0 0.0
        %388 = vmatprep.subr.mxu0 0.0
        %389 = vmatpush1.msra.mxu0 0.0
        %390 = vmatprep.subr.mxu0 0.0
        %391 = vmatpush1.msra.mxu0 0.0
        %392 = vmatprep.subr.mxu0 0.0
        %393 = vmatpush1.msra.mxu0 0.0
        %394 = vmatprep.subr.mxu0 0.0
        %395 = vmatpush1.msra.mxu0 0.0
        %396 = vmatprep.subr.mxu0 0.0
        %397 = vmatpush1.msra.mxu0 0.0
        %398 = vmatprep.subr.mxu0 0.0
        %399 = vmatpush1.msra.mxu0 0.0
        %400 = vmatprep.subr.mxu0 0.0
        %401 = vmatpush1.msra.mxu0 0.0
        %402 = vmatprep.subr.mxu0 0.0
        %403 = vmatpush1.msra.mxu0 0.0
        %404 = vmatprep.subr.mxu0 0.0
        %405 = vmatpush1.msra.mxu0 0.0
        %406 = vmatprep.subr.mxu0 0.0
        %407 = vmatpush1.msra.mxu0 0.0
        %408 = vmatprep.mubr.f32.mxu0 0.0
        %409 = vmatmul.mubr.f32.gmra.mrb[0].mxu0 %v342
        %v410 = vpop.f32.mrb[0].mxu0
        %v411 = vadd.f32 %v338, %v410
        %v412 = vpop.f32.mrb[0].mxu0
        %413 = vdwg.mxu0
        %418 = vrot.lane.b32.xlu0 %v329, 96
        %v419 = vpop.permute.xlu0 %418
        %420 = vrot.lane.b32.xlu0 %v330, 96
        %v421 = vpop.permute.xlu0 %420
        %422 = vrot.lane.b32.xlu0 %v331, 96
        %v423 = vpop.permute.xlu0 %422
        %424 = vrot.lane.b32.xlu0 %v332, 96
        %v425 = vpop.permute.xlu0 %424
        %430 = vrot.lane.b32.xlu0 %v338, 96
        %v431 = vpop.permute.xlu0 %430
        %v434 = vsel %vm340, %v327, 0
        %436 = vmatprep.subr.mxu0 0.0
        %437 = vmatpush1.msra.mxu0 %v419
        %438 = vmatprep.subr.mxu0 0.0
        %439 = vmatpush1.msra.mxu0 %v421
        %440 = vmatprep.subr.mxu0 0.0
        %441 = vmatpush1.msra.mxu0 %v423
        %442 = vmatprep.subr.mxu0 0.0
        %443 = vmatpush1.msra.mxu0 %v425
        %444 = vmatprep.subr.mxu0 0.0
        %445 = vmatpush1.msra.mxu0 0.0
        %446 = vmatprep.subr.mxu0 0.0
        %447 = vmatpush1.msra.mxu0 0.0
        %448 = vmatprep.subr.mxu0 0.0
        %449 = vmatpush1.msra.mxu0 0.0
        %450 = vmatprep.subr.mxu0 0.0
        %451 = vmatpush1.msra.mxu0 0.0
        %452 = vmatprep.subr.mxu0 0.0
        %453 = vmatpush1.msra.mxu0 0.0
        %454 = vmatprep.subr.mxu0 0.0
        %455 = vmatpush1.msra.mxu0 0.0
        %456 = vmatprep.subr.mxu0 0.0
        %457 = vmatpush1.msra.mxu0 0.0
        %458 = vmatprep.subr.mxu0 0.0
        %459 = vmatpush1.msra.mxu0 0.0
        %460 = vmatprep.subr.mxu0 0.0
        %461 = vmatpush1.msra.mxu0 0.0
        %462 = vmatprep.subr.mxu0 0.0
        %463 = vmatpush1.msra.mxu0 0.0
        %464 = vmatprep.subr.mxu0 0.0
        %465 = vmatpush1.msra.mxu0 0.0
        %466 = vmatprep.subr.mxu0 0.0
        %467 = vmatpush1.msra.mxu0 0.0
        %468 = vmatprep.subr.mxu0 0.0
        %469 = vmatpush1.msra.mxu0 0.0
        %470 = vmatprep.subr.mxu0 0.0
        %471 = vmatpush1.msra.mxu0 0.0
        %472 = vmatprep.subr.mxu0 0.0
        %473 = vmatpush1.msra.mxu0 0.0
        %474 = vmatprep.subr.mxu0 0.0
        %475 = vmatpush1.msra.mxu0 0.0
        %476 = vmatprep.subr.mxu0 0.0
        %477 = vmatpush1.msra.mxu0 0.0
        %478 = vmatprep.subr.mxu0 0.0
        %479 = vmatpush1.msra.mxu0 0.0
        %480 = vmatprep.subr.mxu0 0.0
        %481 = vmatpush1.msra.mxu0 0.0
        %482 = vmatprep.subr.mxu0 0.0
        %483 = vmatpush1.msra.mxu0 0.0
        %484 = vmatprep.subr.mxu0 0.0
        %485 = vmatpush1.msra.mxu0 0.0
        %486 = vmatprep.subr.mxu0 0.0
        %487 = vmatpush1.msra.mxu0 0.0
        %488 = vmatprep.subr.mxu0 0.0
        %489 = vmatpush1.msra.mxu0 0.0
        %490 = vmatprep.subr.mxu0 0.0
        %491 = vmatpush1.msra.mxu0 0.0
        %492 = vmatprep.subr.mxu0 0.0
        %493 = vmatpush1.msra.mxu0 0.0
        %494 = vmatprep.subr.mxu0 0.0
        %495 = vmatpush1.msra.mxu0 0.0
        %496 = vmatprep.subr.mxu0 0.0
        %497 = vmatpush1.msra.mxu0 0.0
        %498 = vmatprep.subr.mxu0 0.0
        %499 = vmatpush1.msra.mxu0 0.0
        %500 = vmatprep.mubr.f32.mxu0 0.0
        %501 = vmatmul.mubr.f32.gmra.mrb[0].mxu0 %v434
        %v502 = vpop.f32.mrb[0].mxu0
        %v503 = vadd.f32 %v431, %v502
        %v504 = vpop.f32.mrb[0].mxu0
        %505 = vdwg.mxu0
        %506 = vrot.lane.b32.xlu0 %v329, 64
        %v507 = vpop.permute.xlu0 %506
        %508 = vrot.lane.b32.xlu0 %v330, 64
        %v509 = vpop.permute.xlu0 %508
        %510 = vrot.lane.b32.xlu0 %v331, 64
        %v511 = vpop.permute.xlu0 %510
        %512 = vrot.lane.b32.xlu0 %v332, 64
        %v513 = vpop.permute.xlu0 %512
        %518 = vrot.lane.b32.xlu0 %v338, 64
        %v519 = vpop.permute.xlu0 %518
        %v522 = vsel %vm340, %v328, 0
        %524 = vmatprep.subr.mxu0 0.0
        %525 = vmatpush1.msra.mxu0 %v507
        %526 = vmatprep.subr.mxu0 0.0
        %527 = vmatpush1.msra.mxu0 %v509
        %528 = vmatprep.subr.mxu0 0.0
        %529 = vmatpush1.msra.mxu0 %v511
        %530 = vmatprep.subr.mxu0 0.0
        %531 = vmatpush1.msra.mxu0 %v513
        %532 = vmatprep.subr.mxu0 0.0
        %533 = vmatpush1.msra.mxu0 0.0
        %534 = vmatprep.subr.mxu0 0.0
        %535 = vmatpush1.msra.mxu0 0.0
        %536 = vmatprep.subr.mxu0 0.0
        %537 = vmatpush1.msra.mxu0 0.0
        %538 = vmatprep.subr.mxu0 0.0
        %539 = vmatpush1.msra.mxu0 0.0
        %540 = vmatprep.subr.mxu0 0.0
        %541 = vmatpush1.msra.mxu0 0.0
        %542 = vmatprep.subr.mxu0 0.0
        %543 = vmatpush1.msra.mxu0 0.0
        %544 = vmatprep.subr.mxu0 0.0
        %545 = vmatpush1.msra.mxu0 0.0
        %546 = vmatprep.subr.mxu0 0.0
        %547 = vmatpush1.msra.mxu0 0.0
        %548 = vmatprep.subr.mxu0 0.0
        %549 = vmatpush1.msra.mxu0 0.0
        %550 = vmatprep.subr.mxu0 0.0
        %551 = vmatpush1.msra.mxu0 0.0
        %552 = vmatprep.subr.mxu0 0.0
        %553 = vmatpush1.msra.mxu0 0.0
        %554 = vmatprep.subr.mxu0 0.0
        %555 = vmatpush1.msra.mxu0 0.0
        %556 = vmatprep.subr.mxu0 0.0
        %557 = vmatpush1.msra.mxu0 0.0
        %558 = vmatprep.subr.mxu0 0.0
        %559 = vmatpush1.msra.mxu0 0.0
        %560 = vmatprep.subr.mxu0 0.0
        %561 = vmatpush1.msra.mxu0 0.0
        %562 = vmatprep.subr.mxu0 0.0
        %563 = vmatpush1.msra.mxu0 0.0
        %564 = vmatprep.subr.mxu0 0.0
        %565 = vmatpush1.msra.mxu0 0.0
        %566 = vmatprep.subr.mxu0 0.0
        %567 = vmatpush1.msra.mxu0 0.0
        %568 = vmatprep.subr.mxu0 0.0
        %569 = vmatpush1.msra.mxu0 0.0
        %570 = vmatprep.subr.mxu0 0.0
        %571 = vmatpush1.msra.mxu0 0.0
        %572 = vmatprep.subr.mxu0 0.0
        %573 = vmatpush1.msra.mxu0 0.0
        %574 = vmatprep.subr.mxu0 0.0
        %575 = vmatpush1.msra.mxu0 0.0
        %576 = vmatprep.subr.mxu0 0.0
        %577 = vmatpush1.msra.mxu0 0.0
        %578 = vmatprep.subr.mxu0 0.0
        %579 = vmatpush1.msra.mxu0 0.0
        %580 = vmatprep.subr.mxu0 0.0
        %581 = vmatpush1.msra.mxu0 0.0
        %582 = vmatprep.subr.mxu0 0.0
        %583 = vmatpush1.msra.mxu0 0.0
        %584 = vmatprep.subr.mxu0 0.0
        %585 = vmatpush1.msra.mxu0 0.0
        %586 = vmatprep.subr.mxu0 0.0
        %587 = vmatpush1.msra.mxu0 0.0
        %588 = vmatprep.mubr.f32.mxu0 0.0
        %589 = vmatmul.mubr.f32.gmra.mrb[0].mxu0 %v522
        %v590 = vpop.f32.mrb[0].mxu0
        %v591 = vadd.f32 %v519, %v590
        %v592 = vpop.f32.mrb[0].mxu0
        %593 = vdwg.mxu0
        %v595 = vsel %vm340, %v411, 0
        %v598 = vsel %vm340, %v503, 0
        %600 = vmatprep.subr.mxu0 0.0
        %601 = vmatpush1.xpose.msra.mxu0 %v598
        %602 = vmatprep.subr.mxu0 0.0
        %603 = vmatpush1.xpose.msra.mxu0 0.0
        %604 = vmatprep.subr.mxu0 0.0
        %605 = vmatpush1.xpose.msra.mxu0 0.0
        %606 = vmatprep.subr.mxu0 0.0
        %607 = vmatpush1.xpose.msra.mxu0 0.0
        %608 = vmatprep.subr.mxu0 0.0
        %609 = vmatpush1.xpose.msra.mxu0 0.0
        %610 = vmatprep.subr.mxu0 0.0
        %611 = vmatpush1.xpose.msra.mxu0 0.0
        %612 = vmatprep.subr.mxu0 0.0
        %613 = vmatpush1.xpose.msra.mxu0 0.0
        %614 = vmatprep.subr.mxu0 0.0
        %615 = vmatpush1.xpose.msra.mxu0 0.0
        %616 = vmatprep.subr.mxu0 0.0
        %617 = vmatpush1.xpose.msra.mxu0 0.0
        %618 = vmatprep.subr.mxu0 0.0
        %619 = vmatpush1.xpose.msra.mxu0 0.0
        %620 = vmatprep.subr.mxu0 0.0
        %621 = vmatpush1.xpose.msra.mxu0 0.0
        %622 = vmatprep.subr.mxu0 0.0
        %623 = vmatpush1.xpose.msra.mxu0 0.0
        %624 = vmatprep.subr.mxu0 0.0
        %625 = vmatpush1.xpose.msra.mxu0 0.0
        %626 = vmatprep.subr.mxu0 0.0
        %627 = vmatpush1.xpose.msra.mxu0 0.0
        %628 = vmatprep.subr.mxu0 0.0
        %629 = vmatpush1.xpose.msra.mxu0 0.0
        %630 = vmatprep.subr.mxu0 0.0
        %631 = vmatpush1.xpose.msra.mxu0 0.0
        %632 = vmatprep.subr.mxu0 0.0
        %633 = vmatpush1.xpose.msra.mxu0 0.0
        %634 = vmatprep.subr.mxu0 0.0
        %635 = vmatpush1.xpose.msra.mxu0 0.0
        %636 = vmatprep.subr.mxu0 0.0
        %637 = vmatpush1.xpose.msra.mxu0 0.0
        %638 = vmatprep.subr.mxu0 0.0
        %639 = vmatpush1.xpose.msra.mxu0 0.0
        %640 = vmatprep.subr.mxu0 0.0
        %641 = vmatpush1.xpose.msra.mxu0 0.0
        %642 = vmatprep.subr.mxu0 0.0
        %643 = vmatpush1.xpose.msra.mxu0 0.0
        %644 = vmatprep.subr.mxu0 0.0
        %645 = vmatpush1.xpose.msra.mxu0 0.0
        %646 = vmatprep.subr.mxu0 0.0
        %647 = vmatpush1.xpose.msra.mxu0 0.0
        %648 = vmatprep.subr.mxu0 0.0
        %649 = vmatpush1.xpose.msra.mxu0 0.0
        %650 = vmatprep.subr.mxu0 0.0
        %651 = vmatpush1.xpose.msra.mxu0 0.0
        %652 = vmatprep.subr.mxu0 0.0
        %653 = vmatpush1.xpose.msra.mxu0 0.0
        %654 = vmatprep.subr.mxu0 0.0
        %655 = vmatpush1.xpose.msra.mxu0 0.0
        %656 = vmatprep.subr.mxu0 0.0
        %657 = vmatpush1.xpose.msra.mxu0 0.0
        %658 = vmatprep.subr.mxu0 0.0
        %659 = vmatpush1.xpose.msra.mxu0 0.0
        %660 = vmatprep.subr.mxu0 0.0
        %661 = vmatpush1.xpose.msra.mxu0 0.0
        %662 = vmatprep.subr.mxu0 0.0
        %663 = vmatpush1.xpose.msra.mxu0 0.0
        %664 = vmatprep.mubr.f32.mxu0 0.0
        %665 = vmatmul.mubr.f32.gmra.mrb[0].mxu0 %v595
        %v666 = vpop.f32.mrb[0].mxu0
        %v667 = vadd.f32 0.0, %v666
        %v668 = vpop.f32.mrb[0].mxu0
        %669 = vdwg.mxu0
        %vm670 = vcmask 64512
        %v671 = vsel %vm670, %v667, -inf
        %672 = vmax.xlane.f32.xlu0 %v671
        %v673 = vpop.xlane.xlu0 %672
        %v674 = vsub.f32 %v667, %v673
        %v675 = vmul.f32 %v674, 1.442695
        %v676 = vpow.pop %v675
        %v677 = vsel %vm670, %v676, 0.0
        %678 = vadd.xlane.f32.xlu0 %v677
        %v679 = vpop.xlane.xlu0 %678
        %v680 = vrcp.pop %v679
        %v681 = vmul.f32 %v676, %v680
        %v683 = vsel %vm670, %v681, 0
        %685 = vmatprep.subr.mxu0 0.0
        %686 = vmatpush1.msra.mxu0 %v591
        %687 = vmatprep.subr.mxu0 0.0
        %688 = vmatpush1.msra.mxu0 0.0
        %689 = vmatprep.subr.mxu0 0.0
        %690 = vmatpush1.msra.mxu0 0.0
        %691 = vmatprep.subr.mxu0 0.0
        %692 = vmatpush1.msra.mxu0 0.0
        %693 = vmatprep.subr.mxu0 0.0
        %694 = vmatpush1.msra.mxu0 0.0
        %695 = vmatprep.subr.mxu0 0.0
        %696 = vmatpush1.msra.mxu0 0.0
        %697 = vmatprep.subr.mxu0 0.0
        %698 = vmatpush1.msra.mxu0 0.0
        %699 = vmatprep.subr.mxu0 0.0
        %700 = vmatpush1.msra.mxu0 0.0
        %701 = vmatprep.subr.mxu0 0.0
        %702 = vmatpush1.msra.mxu0 0.0
        %703 = vmatprep.subr.mxu0 0.0
        %704 = vmatpush1.msra.mxu0 0.0
        %705 = vmatprep.subr.mxu0 0.0
        %706 = vmatpush1.msra.mxu0 0.0
        %707 = vmatprep.subr.mxu0 0.0
        %708 = vmatpush1.msra.mxu0 0.0
        %709 = vmatprep.subr.mxu0 0.0
        %710 = vmatpush1.msra.mxu0 0.0
        %711 = vmatprep.subr.mxu0 0.0
        %712 = vmatpush1.msra.mxu0 0.0
        %713 = vmatprep.subr.mxu0 0.0
        %714 = vmatpush1.msra.mxu0 0.0
        %715 = vmatprep.subr.mxu0 0.0
        %716 = vmatpush1.msra.mxu0 0.0
        %717 = vmatprep.subr.mxu0 0.0
        %718 = vmatpush1.msra.mxu0 0.0
        %719 = vmatprep.subr.mxu0 0.0
        %720 = vmatpush1.msra.mxu0 0.0
        %721 = vmatprep.subr.mxu0 0.0
        %722 = vmatpush1.msra.mxu0 0.0
        %723 = vmatprep.subr.mxu0 0.0
        %724 = vmatpush1.msra.mxu0 0.0
        %725 = vmatprep.subr.mxu0 0.0
        %726 = vmatpush1.msra.mxu0 0.0
        %727 = vmatprep.subr.mxu0 0.0
        %728 = vmatpush1.msra.mxu0 0.0
        %729 = vmatprep.subr.mxu0 0.0
        %730 = vmatpush1.msra.mxu0 0.0
        %731 = vmatprep.subr.mxu0 0.0
        %732 = vmatpush1.msra.mxu0 0.0
        %733 = vmatprep.subr.mxu0 0.0
        %734 = vmatpush1.msra.mxu0 0.0
        %735 = vmatprep.subr.mxu0 0.0
        %736 = vmatpush1.msra.mxu0 0.0
        %737 = vmatprep.subr.mxu0 0.0
        %738 = vmatpush1.msra.mxu0 0.0
        %739 = vmatprep.subr.mxu0 0.0
        %740 = vmatpush1.msra.mxu0 0.0
        %741 = vmatprep.subr.mxu0 0.0
        %742 = vmatpush1.msra.mxu0 0.0
        %743 = vmatprep.subr.mxu0 0.0
        %744 = vmatpush1.msra.mxu0 0.0
        %745 = vmatprep.subr.mxu0 0.0
        %746 = vmatpush1.msra.mxu0 0.0
        %747 = vmatprep.subr.mxu0 0.0
        %748 = vmatpush1.msra.mxu0 0.0
        %749 = vmatprep.mubr.f32.mxu0 0.0
        %750 = vmatmul.mubr.f32.gmra.mrb[0].mxu0 %v683
        %v751 = vpop.f32.mrb[0].mxu0
        %v752 = vadd.f32 0.0, %v751
        %v753 = vpop.f32.mrb[0].mxu0
        %754 = vdwg.mxu0
        %755 = vrot.lane.b32.xlu0 %v329, 32
        %v756 = vpop.permute.xlu0 %755
        %757 = vrot.lane.b32.xlu0 %v330, 32
        %v758 = vpop.permute.xlu0 %757
        %759 = vrot.lane.b32.xlu0 %v331, 32
        %v760 = vpop.permute.xlu0 %759
        %761 = vrot.lane.b32.xlu0 %v332, 32
        %v762 = vpop.permute.xlu0 %761
        %767 = vrot.lane.b32.xlu0 %v338, 32
        %v768 = vpop.permute.xlu0 %767
        %v771 = vsel %vm340, %v752, 0
        %773 = vmatprep.subr.mxu0 0.0
        %774 = vmatpush1.msra.mxu0 %v756
        %775 = vmatprep.subr.mxu0 0.0
        %776 = vmatpush1.msra.mxu0 %v758
        %777 = vmatprep.subr.mxu0 0.0
        %778 = vmatpush1.msra.mxu0 %v760
        %779 = vmatprep.subr.mxu0 0.0
        %780 = vmatpush1.msra.mxu0 %v762
        %781 = vmatprep.subr.mxu0 0.0
        %782 = vmatpush1.msra.mxu0 0.0
        %783 = vmatprep.subr.mxu0 0.0
        %784 = vmatpush1.msra.mxu0 0.0
        %785 = vmatprep.subr.mxu0 0.0
        %786 = vmatpush1.msra.mxu0 0.0
        %787 = vmatprep.subr.mxu0 0.0
        %788 = vmatpush1.msra.mxu0 0.0
        %789 = vmatprep.subr.mxu0 0.0
        %790 = vmatpush1.msra.mxu0 0.0
        %791 = vmatprep.subr.mxu0 0.0
        %792 = vmatpush1.msra.mxu0 0.0
        %793 = vmatprep.subr.mxu0 0.0
        %794 = vmatpush1.msra.mxu0 0.0
        %795 = vmatprep.subr.mxu0 0.0
        %796 = vmatpush1.msra.mxu0 0.0
        %797 = vmatprep.subr.mxu0 0.0
        %798 = vmatpush1.msra.mxu0 0.0
        %799 = vmatprep.subr.mxu0 0.0
        %800 = vmatpush1.msra.mxu0 0.0
        %801 = vmatprep.subr.mxu0 0.0
        %802 = vmatpush1.msra.mxu0 0.0
        %803 = vmatprep.subr.mxu0 0.0
        %804 = vmatpush1.msra.mxu0 0.0
        %805 = vmatprep.subr.mxu0 0.0
        %806 = vmatpush1.msra.mxu0 0.0
        %807 = vmatprep.subr.mxu0 0.0
        %808 = vmatpush1.msra.mxu0 0.0
        %809 = vmatprep.subr.mxu0 0.0
        %810 = vmatpush1.msra.mxu0 0.0
        %811 = vmatprep.subr.mxu0 0.0
        %812 = vmatpush1.msra.mxu0 0.0
        %813 = vmatprep.subr.mxu0 0.0
        %814 = vmatpush1.msra.mxu0 0.0
        %815 = vmatprep.subr.mxu0 0.0
        %816 = vmatpush1.msra.mxu0 0.0
        %817 = vmatprep.subr.mxu0 0.0
        %818 = vmatpush1.msra.mxu0 0.0
        %819 = vmatprep.subr.mxu0 0.0
        %820 = vmatpush1.msra.mxu0 0.0
        %821 = vmatprep.subr.mxu0 0.0
        %822 = vmatpush1.msra.mxu0 0.0
        %823 = vmatprep.subr.mxu0 0.0
        %824 = vmatpush1.msra.mxu0 0.0
        %825 = vmatprep.subr.mxu0 0.0
        %826 = vmatpush1.msra.mxu0 0.0
        %827 = vmatprep.subr.mxu0 0.0
        %828 = vmatpush1.msra.mxu0 0.0
        %829 = vmatprep.subr.mxu0 0.0
        %830 = vmatpush1.msra.mxu0 0.0
        %831 = vmatprep.subr.mxu0 0.0
        %832 = vmatpush1.msra.mxu0 0.0
        %833 = vmatprep.subr.mxu0 0.0
        %834 = vmatpush1.msra.mxu0 0.0
        %835 = vmatprep.subr.mxu0 0.0
        %836 = vmatpush1.msra.mxu0 0.0
        %837 = vmatprep.mubr.f32.mxu0 0.0
        %838 = vmatmul.mubr.f32.gmra.mrb[0].mxu0 %v771
        %v839 = vpop.f32.mrb[0].mxu0
        %v840 = vadd.f32 %v768, %v839
        %v841 = vpop.f32.mrb[0].mxu0
        %842 = vdwg.mxu0
        %843 = vst.msk [vmem:[%s325] sm:$0xff] %vm340, %v840
        %s844 = sand.u32 %s154, 1
        %s845 = scalar_lea.sflag [#allocation4], %s844
        %s846 = sand.u32 %s154, 1
        %s847 = smul.addr %s846, 8
        %s848 = scalar_lea.vmem [#allocation10], %s847
        // Predicated region
        $region57: #{tpu_custom_call.1} parent=39 // pred_check
          %p849 = pneg %p164
        $region58: #{tpu_custom_call.1} parent=39 // pred_check_branch
          %851 = sbr.rel (%p849) target = $region60
        $region59: #{tpu_custom_call.1} parent=39 // pred_region
          %s853 = ssub.s32 128, 128
          %854 = vsyncadd %s845, %s853
          %s855 = smul.addr %s26, 128
          %s856 = scalar_lea.hbm %s5, %s855
          %s858 = sshll.u32 %s848, 4
          %s859 = int_to_ptr.vmem [resolvable:$true] %s858
          %861 = dma.vmem_to_hbm [thread:$0]  %s859, 128, %s856, %s845
        $region60: #{tpu_custom_call.1} parent=39 // pred_fallthru
          _
      $region40: #{tpu_custom_call.1} parent=5 // pred_fallthru
        _
      %p862 = scmp.le.s32.totalorder 2, %s21
      // Predicated region
      $region61: #{tpu_custom_call.1} parent=5 // pred_check
        %p863 = pneg %p862
      $region62: #{tpu_custom_call.1} parent=5 // pred_check_branch
        %865 = sbr.rel (%p863) target = $region64
      $region63: #{tpu_custom_call.1} parent=5 // pred_region
        %s866 = ssub.s32 %s21, 2
        // Predicated region
        $region65: #{tpu_custom_call.1} parent=63 // pred_check
          %p867 = pneg %p170
        $region66: #{tpu_custom_call.1} parent=63 // pred_check_branch
          %869 = sbr.rel (%p867) target = $region68
        $region67: #{tpu_custom_call.1} parent=63 // pred_region
          %s870 = sand.u32 %s155, 1
          %s871 = scalar_lea.sflag [#allocation4], %s870
          %s872 = sand.u32 %s155, 1
          %s873 = smul.addr %s872, 8
          %s874 = scalar_lea.vmem [#allocation10], %s873
          %875 = dma.done %s871, 128
        $region68: #{tpu_custom_call.1} parent=63 // pred_fallthru
          _
      $region64: #{tpu_custom_call.1} parent=5 // pred_fallthru
        _
    $region6: #{tpu_custom_call.1} parent=1 // loop_footer
      %s25 = sadd.s32 1, %s21
    $region7: #{tpu_custom_call.1} parent=1 // loop_footer_branch
      %20 = sbr.rel target = $region3
    $region8: #{tpu_custom_call.1} parent=1 // loop_exit
      _
    %876 = vsyncpa [#allocation3], 1
    %s877 = scalar_lea.sflag [#allocation3], 1
    %878 = vsyncpa %s877, 1
    %879 = vsyncpa [#allocation6], 1
    %s880 = scalar_lea.sflag [#allocation6], 1
    %881 = vsyncpa %s880, 1
    %882 = vsyncpa [#allocation9], 1
    %883 = vsyncpa [#allocation4], 1
    %s884 = scalar_lea.sflag [#allocation4], 1
    %885 = vsyncpa %s884, 1

</llo_original>
